<compile_context>
chip_gen: v5e
topology: v5e:2x2
jax: 0.10.0
libtpu: 0.0.40
codegen_flags: <defaults>
</compile_context>

<pallas_src>
import functools
import math

import jax
import jax.numpy as jnp
from jax.experimental import pallas as pl
from jax.experimental.pallas import tpu as pltpu


def _round_up(x, m):
    return (x + m - 1) // m * m


_ROLL_IS_NUMPY_LIKE = None


def _roll_is_numpy_like():
    """Detect pltpu.roll's rotation direction once with a tiny probe kernel."""
    global _ROLL_IS_NUMPY_LIKE
    if _ROLL_IS_NUMPY_LIKE is None:
        def probe(x_ref, o_ref):
            o_ref[...] = pltpu.roll(x_ref[...], shift=1, axis=1)

        with jax.ensure_compile_time_eval():
            x = jax.lax.broadcasted_iota(jnp.float32, (8, 128), 1)
            y = pl.pallas_call(
                probe,
                out_shape=jax.ShapeDtypeStruct((8, 128), jnp.float32))(x)
            # numpy semantics: roll by +1 puts element 127 at position 0.
            _ROLL_IS_NUMPY_LIKE = bool(y[0, 0] == 127.0)
    return _ROLL_IS_NUMPY_LIKE


def _vmem_capacity_bytes():
    """Per-generation VMEM capacity (conservative fallback = v7x 64 MiB)."""
    try:
        info = pltpu.get_tpu_info()
        for name in ("vmem_capacity_bytes", "vmem_size_bytes", "vmem_bytes"):
            cap = getattr(info, name, None)
            if cap:
                return int(cap)
    except Exception:
        pass
    return 64 * 1024 * 1024


def _vmem_estimate(cin_pad, cout_t, k_dim, m, halo_pad, csize, osize):
    return (2 * 2 * cin_pad * m * csize        # A & B input blocks, dbl-buffered
            + 2 * cout_t * m * osize           # output block, dbl-buffered
            + 2 * cout_t * k_dim * csize       # weight block, dbl-buffered
            + cin_pad * (m + halo_pad) * csize  # extended-strip scratch
            + k_dim * m * csize                # im2col patch scratch
            + cout_t * m * 4)                  # f32 matmul result staging


def _choose_tiling(hout, wp, kh, kw, cin_pad, cout_t, k_dim, csize, osize,
                   n_batch, vmem_budget):
    """Pick strip height / row pitch: minimize padded HBM lanes, fit VMEM
    budget, prefer >= 8 grid steps (pipeline depth + 2 TensorCores)."""
    best_key, best = None, None
    for th in range(1, hout + 1):
        gran = 128 // math.gcd(th, 128)
        wrow = _round_up(wp, gran)
        m = th * wrow                                   # multiple of 128
        halo_len = (kh - 1) * wrow + (kw - 1)
        if halo_len > m:            # the s+1 block cannot supply the halo
            continue
        halo_pad = _round_up(max(halo_len, 1), 128)
        n_strips = -(-hout // th)
        est = _vmem_estimate(cin_pad, cout_t, k_dim, m, halo_pad, csize, osize)
        steps = n_batch * n_strips
        key = (est > vmem_budget,   # prefer fitting the VMEM budget
               steps < 8,           # prefer enough steps per TensorCore
               n_strips * m,        # minimize padded lanes (HBM bytes)
               n_strips)            # tie-break: fewer / larger strips
        if best_key is None or key < best_key:
            best_key, best = key, (th, wrow, m, halo_pad, n_strips)
    if best is None:
        raise NotImplementedError(
            "BasicConv2d Pallas kernel: feature map too small for the "
            f"strip/halo scheme (hout={hout}, kh={kh}).")
    return best


def _conv_bn_relu_kernel(a_ref, b_ref, w_ref, shift_ref, o_ref,
                         ext_ref, patch_ref, *,
                         wrow, kh_sz, kw_sz, cin_pad, m, halo_pad,
                         roll_numpy_like):
    """One grid step = one (batch, H-strip, Cout-tile) output block.

    a_ref     : (1, Cin_pad, M)          flattened row-pitched strip s
    b_ref     : (1, Cin_pad, M)          flattened strip s+1 (halo source)
    w_ref     : (Cout_t, KH*KW*Cin_pad)  BN-scale-folded weights
    shift_ref : (Cout_t, 1)              folded BN shift (f32, incl. conv bias)
    o_ref     : (1, Cout_t, M)           lane-dense flattened output strip
    ext_ref   : (Cin_pad, M+halo_pad)    strip + halo scratch
    patch_ref : (KH*KW*Cin_pad, M)       im2col patch scratch
    """
    lc = m + halo_pad

    # Build the im2col patch once per (batch, strip); it is reused for every
    # Cout tile (the Cout grid axis is innermost and "arbitrary").
    @pl.when(pl.program_id(2) == 0)
    def _build_patch():
        ext_ref[:, :m] = a_ref[0]
        ext_ref[:, m:] = b_ref[0, :, :halo_pad]
        for t_kh in range(kh_sz):
            for t_kw in range(kw_sz):
                start = t_kh * wrow + t_kw
                tap = t_kh * kw_sz + t_kw
                if start == 0:
                    shifted = ext_ref[:, :m]
                else:
                    # Left-rotate by `start` on the XLU, then take the aligned
                    # leading M lanes (wrap-around only reaches garbage cols).
                    amt = (lc - start) % lc if roll_numpy_like else start
                    shifted = pltpu.roll(ext_ref[...], shift=amt,
                                         axis=1)[:, :m]
                patch_ref[tap * cin_pad:(tap + 1) * cin_pad, :] = shifted

    # Single fused-tap MXU matmul (contraction K = KH*KW*Cin_pad), f32 acc,
    # folded-BN shift + ReLU epilogue, one lane-dense bulk store.
    y = jnp.dot(w_ref[...], patch_ref[...], preferred_element_type=jnp.float32)
    y = jnp.maximum(y + shift_ref[...], 0.0)
    o_ref[0] = y.astype(o_ref.dtype)


def basic_conv2d(x_nchw, weight_oihw, bias, gamma, beta, run_mean, run_var,
                 *, eps=1e-3, padding=1, compute_dtype=jnp.bfloat16,
                 training=False):
    """Equivalent of BasicConv2d.forward (eval-mode BN), NCHW in / NCHW out.

    Only stride=1, dilation=1, groups=1 convolutions are supported.
    """
    if training:
        # TODO(synk): training-mode BN (batch statistics) is not implemented.
        raise NotImplementedError("training-mode BatchNorm is not supported")

    n, cin, hin, win = x_nchw.shape
    cout, cin_w, kh, kw = weight_oihw.shape
    assert cin_w == cin, "grouped convolution is not supported"
    p = int(padding)
    hout = hin + 2 * p - kh + 1
    wout = win + 2 * p - kw + 1
    hp, wp = hin + 2 * p, win + 2 * p
    assert hout >= 1 and wout >= 1

    cdt = jnp.dtype(compute_dtype)
    csize = cdt.itemsize
    osize = jnp.dtype(x_nchw.dtype).itemsize
    cin_pad = _round_up(cin, 8)              # aligned patch-row groups
    cout_pad = _round_up(cout, 8)            # aligned sublane output dim

    # Cout tile: multiple of 8, <= 256, divides cout_pad.
    cout_t = cout_pad
    for cand in range(min(cout_pad, 256), 7, -8):
        if cout_pad % cand == 0:
            cout_t = cand
            break
    n_ct = cout_pad // cout_t
    n_taps = kh * kw
    k_dim = n_taps * cin_pad

    cap = _vmem_capacity_bytes()
    th, wrow, m, halo_pad, n_strips = _choose_tiling(
        hout, wp, kh, kw, cin_pad, cout_t, k_dim, csize, osize, n,
        vmem_budget=int(0.4 * cap))

    # --- glue (plain JAX): ONE fused pad, free reshape ----------------------
    # Pad: spatial (p), channels -> cin_pad, W -> row pitch wrow, bottom rows
    # so the "strip s+1" halo block always exists and divides evenly.
    hp_pad = max((n_strips + 1) * th, _round_up(hp, th))
    x_pad = jnp.pad(x_nchw.astype(compute_dtype),
                    ((0, 0), (0, cin_pad - cin),
                     (p, hp_pad - hin - p), (p, wrow - win - p)))
    x_flat = x_pad.reshape(n, cin_pad, hp_pad * wrow)     # contiguous -> free

    # Fold BN scale into the weights (conv is linear); fold bias/mean/beta
    # into a per-channel shift.
    bn_scale = gamma / jnp.sqrt(run_var + eps)                       # (Cout,)
    w_folded = weight_oihw * bn_scale[:, None, None, None]
    w2 = jnp.transpose(w_folded, (0, 2, 3, 1))                       # O,KH,KW,I
    w2 = jnp.pad(w2, ((0, cout_pad - cout), (0, 0), (0, 0),
                      (0, cin_pad - cin)))
    w2 = w2.reshape(cout_pad, k_dim).astype(compute_dtype)
    shift = (bias - run_mean) * bn_scale + beta
    shift2 = jnp.pad(shift, (0, cout_pad - cout)).reshape(cout_pad, 1)
    shift2 = shift2.astype(jnp.float32)

    kernel = functools.partial(
        _conv_bn_relu_kernel, wrow=wrow, kh_sz=kh, kw_sz=kw,
        cin_pad=cin_pad, m=m, halo_pad=halo_pad,
        roll_numpy_like=_roll_is_numpy_like())

    est = _vmem_estimate(cin_pad, cout_t, k_dim, m, halo_pad, csize, osize)
    vmem_limit = int(min(0.9 * cap, max(2 * est, 32 * 1024 * 1024)))

    out_flat = pl.pallas_call(
        kernel,
        out_shape=jax.ShapeDtypeStruct((n, cout_pad, n_strips * m),
                                       x_nchw.dtype),
        grid_spec=pltpu.PrefetchScalarGridSpec(
            num_scalar_prefetch=0,
            grid=(n, n_strips, n_ct),
            in_specs=[
                # strip s, and strip s+1 for the halo (same flat array).
                pl.BlockSpec((1, cin_pad, m), lambda b, s, c: (b, 0, s)),
                pl.BlockSpec((1, cin_pad, m), lambda b, s, c: (b, 0, s + 1)),
                # weights / shift: constant across (b, s) -> resident when
                # there is a single Cout tile.
                pl.BlockSpec((cout_t, k_dim), lambda b, s, c: (c, 0)),
                pl.BlockSpec((cout_t, 1), lambda b, s, c: (c, 0)),
            ],
            out_specs=pl.BlockSpec((1, cout_t, m), lambda b, s, c: (b, c, s)),
            scratch_shapes=[
                pltpu.VMEM((cin_pad, m + halo_pad), compute_dtype),
                pltpu.VMEM((k_dim, m), compute_dtype),
            ]),
        compiler_params=pltpu.CompilerParams(
            dimension_semantics=("parallel", "parallel", "arbitrary"),
            vmem_limit_bytes=vmem_limit),
    )(x_flat, x_flat, w2, shift2)

    # Flat row-pitched NCHW slab -> NCHW (free reshape + one slice).
    out = out_flat.reshape(n, cout_pad, n_strips * th, wrow)
    return out[:, :cout, :hout, :wout]


def _reference(x, weight, bias, gamma, beta, rm, rv, eps, padding):
    y = jax.lax.conv_general_dilated(
        x, weight, window_strides=(1, 1),
        padding=[(padding, padding), (padding, padding)],
        dimension_numbers=("NCHW", "OIHW", "NCHW"))
    y = y + bias.reshape(1, -1, 1, 1)
    y = (y - rm.reshape(1, -1, 1, 1)) / jnp.sqrt(rv.reshape(1, -1, 1, 1) + eps)
    y = y * gamma.reshape(1, -1, 1, 1) + beta.reshape(1, -1, 1, 1)
    return jnp.maximum(y, 0.0)


if __name__ == "__main__":
    # BasicConv2d(in_channels=4, out_channels=8, kernel_size=3, padding=1)
    N, CIN, COUT, H, W, K, PAD, EPS = 2, 4, 8, 16, 16, 3, 1, 1e-3

    key = jax.random.PRNGKey(0)
    kx, kw_, kb, kg, kbe, km, kv = jax.random.split(key, 7)

    x = jax.random.normal(kx, (N, CIN, H, W), jnp.float32)
    weight = jax.random.normal(kw_, (COUT, CIN, K, K), jnp.float32) * 0.1
    bias = jax.random.normal(kb, (COUT,), jnp.float32) * 0.1
    gamma = 1.0 + 0.1 * jax.random.normal(kg, (COUT,), jnp.float32)
    beta = 0.1 * jax.random.normal(kbe, (COUT,), jnp.float32)
    run_mean = 0.1 * jax.random.normal(km, (COUT,), jnp.float32)
    run_var = jax.random.uniform(kv, (COUT,), jnp.float32, 0.5, 1.5)

    ref = _reference(x, weight, bias, gamma, beta, run_mean, run_var, EPS, PAD)

    # Exact-parity path: f32 streams, tight tolerance.
    out_f32 = basic_conv2d(x, weight, bias, gamma, beta, run_mean, run_var,
                           eps=EPS, padding=PAD, compute_dtype=jnp.float32)
    out_f32 = jax.block_until_ready(out_f32)
    assert out_f32.shape == (N, COUT, H, W), out_f32.shape
    assert jnp.allclose(out_f32, ref, atol=1e-4, rtol=1e-4), \
        float(jnp.max(jnp.abs(out_f32 - ref)))

    # Fast-path default: bf16 x/w streams, f32 accumulation & epilogue.
    out_bf16 = basic_conv2d(x, weight, bias, gamma, beta, run_mean, run_var,
                            eps=EPS, padding=PAD)
    out_bf16 = jax.block_until_ready(out_bf16)
    assert out_bf16.shape == (N, COUT, H, W), out_bf16.shape
    assert jnp.allclose(out_bf16, ref, atol=7e-2, rtol=7e-2), \
        float(jnp.max(jnp.abs(out_bf16 - ref)))

    print("KERNEL_OK")
</pallas_src>

<mosaic_0001>
module attributes {stable_mosaic.version = 11 : i64} {
  func.func @probe(%arg0: memref<8x128xf32, #tpu.memory_space<vmem>>, %arg1: memref<8x128xf32, #tpu.memory_space<vmem>>) attributes {dimension_semantics = [], scalar_prefetch = 0 : i64, scratch_operands = 0 : i64, tpu.core_type = #tpu.core_type<tc>} {
    %c0 = arith.constant 0 : index
    %c0_0 = arith.constant 0 : index
    %0 = vector.load %arg0[%c0, %c0_0] : memref<8x128xf32, #tpu.memory_space<vmem>>, vector<8x128xf32>
    %c1_i32 = arith.constant 1 : i32
    %1 = tpu.dynamic_rotate %0 by %c1_i32 dim 1 : vector<8x128xf32>, i32 -> vector<8x128xf32>
    %c0_1 = arith.constant 0 : index
    %c0_2 = arith.constant 0 : index
    %2 = vector.load %arg1[%c0_1, %c0_2] : memref<8x128xf32, #tpu.memory_space<vmem>>, vector<8x128xf32>
    tpu.vector_store %arg1[%c0_1, %c0_2], %1 {strides = array<i32>} : memref<8x128xf32, #tpu.memory_space<vmem>>, vector<8x128xf32>,
    return
  }
}

</mosaic_0001>

<llo_original>
// kernel: tpu_custom_call.1
$region0: #{tpu_custom_call.1}
  #allocation0 [shape = 'u32[]', space=smem, size = 0x4, offset = 0x4, fixed_abs, tag = 'smem constant byte address 0x4 - core index']
  #allocation1 [shape = 'u32[72,128]{1,0:T(1,128)}', space=vmem, size = 0x9000, scoped, tag = 'internal scratch']
  %s0 = inlined_call_operand.hbm [shape: f32[8,128], index: 0, kind: input, shape index: {}]
  %s1 = inlined_call_operand.hbm [shape: f32[8,128], index: 1, kind: output, shape index: {}]
  %s2 = sld [smem:[#allocation0]]
  $region18: #{tpu_custom_call.1} parent=0
    _
  %s4 = ssub.s32 1, %s2
  %s5 = scalar_select 0, %s4, %s2
  $region1: #{tpu_custom_call.1} parent=0
    #allocation2 [shape = 'u8[4096]{0}', space=vmem, size = 0x1000, scoped, tag = 'input window, operand 0, single buffered']
    #allocation3 [shape = 's32[1]{0}', space=sflag, size = 0x4, scoped, tag = 'scoped memory for tpu_custom_call.1']
    #allocation4 [shape = 's32[1]{0}', space=sflag, size = 0x4, scoped, tag = 'scoped memory for tpu_custom_call.1']
    #allocation5 [shape = 'u8[4096]{0}', space=vmem, size = 0x1000, scoped, tag = 'output window, operand 0, single buffered']
    %6 = vsyncpa [#allocation3], 0
    %7 = vsyncpa [#allocation4], 0
    // Predicated region
    $region2: #{tpu_custom_call.1} parent=1 // pred_check
      _
    $region3: #{tpu_custom_call.1} parent=1 // pred_check_branch
      %9 = sbr.rel (0) target = $region5
    $region4: #{tpu_custom_call.1} parent=1 // pred_region
      %11 = vsyncadd [#allocation3], 0
      %s13 = sshll.u32 %s0, 4
      %s14 = int_to_ptr.hbm [resolvable:$true] %s13
      %s15 = sshll.u32 [#allocation2], 4
      %s16 = int_to_ptr.vmem [resolvable:$true] %s15
      %18 = dma.hbm_to_vmem [thread:$0]  %s14, 128, %s16, [#allocation3]
    $region5: #{tpu_custom_call.1} parent=1 // pred_fallthru
      _
    // Predicated region
    $region6: #{tpu_custom_call.1} parent=1 // pred_check
      _
    $region7: #{tpu_custom_call.1} parent=1 // pred_check_branch
      %20 = sbr.rel (0) target = $region9
    $region8: #{tpu_custom_call.1} parent=1 // pred_region
      %22 = dma.done [#allocation3], 128
    $region9: #{tpu_custom_call.1} parent=1 // pred_fallthru
      _
    %v23 = vld [vmem:[#allocation2] sm:$0xff]
    %24 = vrot.lane.b32.xlu0 %v23, 1
    %v25 = vpop.permute.xlu0 %24
    %26 = vst [vmem:[#allocation5] sm:$0xff] %v25
    // Predicated region
    $region10: #{tpu_custom_call.1} parent=1 // pred_check
      _
    $region11: #{tpu_custom_call.1} parent=1 // pred_check_branch
      %28 = sbr.rel (0) target = $region13
    $region12: #{tpu_custom_call.1} parent=1 // pred_region
      %30 = vsyncadd [#allocation4], 0
      %s32 = sshll.u32 [#allocation5], 4
      %s33 = int_to_ptr.vmem [resolvable:$true] %s32
      %s34 = sshll.u32 %s1, 4
      %s35 = int_to_ptr.hbm [resolvable:$true] %s34
      %37 = dma.vmem_to_hbm [thread:$0]  %s33, 128, %s35, [#allocation4]
    $region13: #{tpu_custom_call.1} parent=1 // pred_fallthru
      _
    // Predicated region
    $region14: #{tpu_custom_call.1} parent=1 // pred_check
      _
    $region15: #{tpu_custom_call.1} parent=1 // pred_check_branch
      %39 = sbr.rel (0) target = $region17
    $region16: #{tpu_custom_call.1} parent=1 // pred_region
      %41 = dma.done [#allocation4], 128
    $region17: #{tpu_custom_call.1} parent=1 // pred_fallthru
      _
    %42 = vsyncpa [#allocation3], 1
    %43 = vsyncpa [#allocation4], 1

</llo_original>
